<compile_context>
chip_gen: v7x
topology: tpu7x:2x2x1
jax: 0.10.0
libtpu: 0.0.40
codegen_flags: <defaults>
</compile_context>

<pallas_src>
import math

import numpy as np

import jax
import jax.numpy as jnp
from jax.experimental import pallas as pl
from jax.experimental.pallas import tpu as pltpu


# ---------------------------------------------------------------------------
# Host-side buffer (equivalent of register_buffer in __init__).
# ---------------------------------------------------------------------------
def _make_pe(d_model: int = 10, max_len: int = 5000) -> jnp.ndarray:
    """(max_len, 1, d_model) positional-encoding buffer, same math as torch."""
    position = np.arange(max_len, dtype=np.float32)[:, None]              # (L, 1)
    c = -math.log(10000.0) / d_model
    sin_div = np.exp(np.arange(0, d_model, 2, dtype=np.float32) * c)
    if d_model % 2 == 0:
        cos_div = sin_div
    else:
        cos_div = np.exp(np.arange(0, d_model - 1, 2, dtype=np.float32) * c)
    pe = np.zeros((max_len, d_model), dtype=np.float32)
    pe[:, 0::2] = np.sin(position * sin_div)
    pe[:, 1::2] = np.cos(position * cos_div)
    return jnp.asarray(pe[:, None, :])                                     # (L, 1, D)


# ---------------------------------------------------------------------------
# Tiling helpers.
# ---------------------------------------------------------------------------
def _tile_budget():
    """(total streamed bytes per grid step, optional vmem_limit_bytes)."""
    kind = ""
    try:
        kind = jax.devices()[0].device_kind.lower()
    except Exception:
        pass
    if "v5" in kind:
        # v5e: default scoped VMEM is only 16 MiB; 2x double-buffer of a 6 MiB
        # step stays safely under it, and at ~0.82 TB/s larger tiles buy little.
        return 6 * 1024 * 1024, None
    if "v6" in kind:
        # v6e: ~85% of HBM roofline needs 1-4 MiB x-tiles; 8 MiB total/step
        # (x-in + x-out + pe) double-buffered fits the 32 MiB default limit.
        return 8 * 1024 * 1024, None
    if "v7" in kind:
        # v7x: 3.2 TB/s HBM -> bigger tiles to amortize the ~0.35us step cost.
        return 12 * 1024 * 1024, 48 * 1024 * 1024
    return 8 * 1024 * 1024, None


def _pick_tile_rows(seq_len: int, row_bytes: int, target_bytes: int,
                    sublane: int) -> int:
    """Seq-tile rows sized by bytes, rounded to the dtype sublane multiple,
    kept to >= 2 grid steps when possible (megacore sharding on v7x)."""
    rows = (target_bytes // max(row_bytes, 1)) // sublane * sublane
    rows = max(sublane, rows)
    if rows >= seq_len:
        half = -(-seq_len // 2)                   # ceil(S / 2)
        half = -(-half // sublane) * sublane      # round up to sublane multiple
        rows = half if half < seq_len else seq_len
    return min(rows, seq_len)


# ---------------------------------------------------------------------------
# Kernel: pure broadcast add (pe already in x dtype).
#   3-D path: x (TS, B, D) + pe (TS, 1, D)  -> sublane broadcast over batch.
#   2-D path: x (TS, B*D) + pe (TS, B*D)    -> plain elementwise add.
# ---------------------------------------------------------------------------
def _pe_add_kernel(x_ref, pe_ref, o_ref):
    o_ref[...] = x_ref[...] + pe_ref[...]


# ---------------------------------------------------------------------------
# Module wrapper (mirrors the PyTorch nn.Module).
# ---------------------------------------------------------------------------
class PositionalEncoding:
    _BYPASS_BYTES = 256 * 1024   # below this, plain XLA add beats kernel launch

    def __init__(self, d_model: int = 10, max_len: int = 5000):
        self.d_model = d_model
        self.max_len = max_len
        self.pe = _make_pe(d_model, max_len)      # (max_len, 1, d_model) float32

    def __call__(self, x: jnp.ndarray, *, force_kernel: bool = False) -> jnp.ndarray:
        S, B, D = x.shape
        assert S <= self.max_len, "seq_len exceeds max_len"
        assert D == self.d_model, "d_model mismatch"
        itemsize = jnp.dtype(x.dtype).itemsize

        # Small-shape bypass: pallas_call launch + pipeline prologue dominates.
        if (S * B * D * itemsize) < self._BYPASS_BYTES and not force_kernel:
            return x + self.pe[:S].astype(x.dtype)

        target_bytes, vmem_limit = _tile_budget()
        sublane = max(8, 32 // itemsize)          # 8 f32, 16 bf16, 32 int8/fp8
        cparams = dict(dimension_semantics=("parallel",))
        if vmem_limit is not None:
            cparams["vmem_limit_bytes"] = vmem_limit

        pe_s = self.pe[:S].astype(x.dtype)        # (S, 1, D), cast once host-side

        if D >= 128:
            # 3-D blocking: lanes already dense, pe broadcast over batch gives
            # a B-fold reduction in pe HBM traffic for free.
            row_bytes = (2 * B * D + D) * itemsize          # x in + x out + pe
            tile = _pick_tile_rows(S, row_bytes, target_bytes, sublane)
            grid = (pl.cdiv(S, tile),)
            return pl.pallas_call(
                _pe_add_kernel,
                out_shape=jax.ShapeDtypeStruct((S, B, D), x.dtype),
                grid=grid,
                in_specs=[
                    pl.BlockSpec((tile, B, D), lambda i: (i, 0, 0)),
                    pl.BlockSpec((tile, 1, D), lambda i: (i, 0, 0)),
                ],
                out_specs=pl.BlockSpec((tile, B, D), lambda i: (i, 0, 0)),
                compiler_params=pltpu.CompilerParams(**cparams),
            )(x, pe_s)

        # D < 128: lane-dense flatten (S, B*D); pe pre-tiled over batch so the
        # kernel stays a zero-VALU streaming add with full-width stores.
        BD = B * D
        x2 = x.reshape(S, BD)                                # contiguous, free
        pe2 = jnp.tile(pe_s[:, 0, :], (1, B))                # (S, B*D), lane j -> d = j % D
        row_bytes = 3 * BD * itemsize                        # x in + pe in + x out
        tile = _pick_tile_rows(S, row_bytes, target_bytes, sublane)
        grid = (pl.cdiv(S, tile),)
        out2 = pl.pallas_call(
            _pe_add_kernel,
            out_shape=jax.ShapeDtypeStruct((S, BD), x.dtype),
            grid=grid,
            in_specs=[
                pl.BlockSpec((tile, BD), lambda i: (i, 0)),
                pl.BlockSpec((tile, BD), lambda i: (i, 0)),
            ],
            out_specs=pl.BlockSpec((tile, BD), lambda i: (i, 0)),
            compiler_params=pltpu.CompilerParams(**cparams),
        )(x2, pe2)
        return out2.reshape(S, B, D)


if __name__ == "__main__":
    # Small demo shapes consistent with the module defaults.
    d_model, max_len = 10, 5000
    module = PositionalEncoding(d_model=d_model, max_len=max_len)

    key = jax.random.PRNGKey(0)
    x_small = jax.random.normal(key, (8, 2, d_model), dtype=jnp.float32)

    # Force the kernel path (2-D lane-dense, D < 128) even at this tiny shape.
    out_small = jax.block_until_ready(module(x_small, force_kernel=True))
    ref_small = x_small + module.pe[:x_small.shape[0]]
    assert out_small.shape == x_small.shape
    assert jnp.allclose(out_small, ref_small, atol=1e-5, rtol=1e-5), "2-D path mismatch"

    # Also exercise the 3-D (D >= 128) sublane-broadcast kernel path.
    mod_big = PositionalEncoding(d_model=128, max_len=512)
    x_big = jax.random.normal(jax.random.PRNGKey(0), (64, 4, 128), dtype=jnp.float32)
    out_big = jax.block_until_ready(mod_big(x_big, force_kernel=True))
    ref_big = x_big + mod_big.pe[:x_big.shape[0]]
    assert jnp.allclose(out_big, ref_big, atol=1e-5, rtol=1e-5), "3-D path mismatch"

    # And the plain-XLA small-shape bypass (default path for tiny inputs).
    out_bypass = jax.block_until_ready(module(x_small))
    assert jnp.allclose(out_bypass, ref_small, atol=1e-5, rtol=1e-5), "bypass mismatch"

    print("KERNEL_OK")
</pallas_src>

<mosaic_0001>
module attributes {stable_mosaic.version = 11 : i64} {
  func.func @_pe_add_kernel(%arg0: i32, %arg1: memref<8x20xf32, #tpu.memory_space<vmem>>, %arg2: memref<8x20xf32, #tpu.memory_space<vmem>>, %arg3: memref<8x20xf32, #tpu.memory_space<vmem>>) attributes {dimension_semantics = [#tpu.dimension_semantics<parallel>], iteration_bounds = array<i64: 1>, scalar_prefetch = 0 : i64, scratch_operands = 0 : i64, tpu.core_type = #tpu.core_type<tc>, window_params = [{transform_indices = @transform_0, window_bounds = array<i64: 8, 20>}, {transform_indices = @transform_1, window_bounds = array<i64: 8, 20>}, {transform_indices = @transform_2, window_bounds = array<i64: 8, 20>}]} {
    %c0 = arith.constant 0 : index
    %c0_0 = arith.constant 0 : index
    %0 = vector.load %arg1[%c0, %c0_0] : memref<8x20xf32, #tpu.memory_space<vmem>>, vector<8x20xf32>
    %c0_1 = arith.constant 0 : index
    %c0_2 = arith.constant 0 : index
    %1 = vector.load %arg2[%c0_1, %c0_2] : memref<8x20xf32, #tpu.memory_space<vmem>>, vector<8x20xf32>
    %2 = arith.addf %0, %1 : vector<8x20xf32>
    %c0_3 = arith.constant 0 : index
    %c0_4 = arith.constant 0 : index
    %3 = vector.load %arg3[%c0_3, %c0_4] : memref<8x20xf32, #tpu.memory_space<vmem>>, vector<8x20xf32>
    tpu.vector_store %arg3[%c0_3, %c0_4], %2 {strides = array<i32>} : memref<8x20xf32, #tpu.memory_space<vmem>>, vector<8x20xf32>,
    return
  }
  func.func @transform_0(%arg0: i32) -> (i32, i32) {
    %c0_i32 = arith.constant 0 : i32
    %c0_i32_0 = arith.constant 0 : i32
    return %arg0, %c0_i32 : i32, i32
  }
  func.func @transform_1(%arg0: i32) -> (i32, i32) {
    %c0_i32 = arith.constant 0 : i32
    %c0_i32_0 = arith.constant 0 : i32
    return %arg0, %c0_i32 : i32, i32
  }
  func.func @transform_2(%arg0: i32) -> (i32, i32) {
    %c0_i32 = arith.constant 0 : i32
    %c0_i32_0 = arith.constant 0 : i32
    return %arg0, %c0_i32 : i32, i32
  }
}

</mosaic_0001>

<llo_original>
// kernel: tpu_custom_call.1
$region0: #{tpu_custom_call.1}
  #allocation0 [shape = 'u32[]', space=smem, size = 0x4, offset = 0x4, fixed_abs, tag = 'smem constant byte address 0x4 - core index']
  #allocation1 [shape = 'u32[144,128]{1,0:T(1,128)}', space=vmem, size = 0x12000, scoped, tag = 'internal scratch']
  %s0 = inlined_call_operand.hbm [shape: f32[8,20], index: 0, kind: input, shape index: {}]
  %s1 = inlined_call_operand.hbm [shape: f32[8,20], index: 1, kind: input, shape index: {}]
  %s2 = inlined_call_operand.hbm [shape: f32[8,20], index: 2, kind: output, shape index: {}]
  %s3 = sld [smem:[#allocation0]]
  $region26: #{tpu_custom_call.1} parent=0
    _
  %s5 = ssub.s32 1, %s3
  %s6 = scalar_select 0, %s5, %s3
  $region1: #{tpu_custom_call.1} parent=0
    #allocation2 [shape = 'u8[4096]{0}', space=vmem, size = 0x1000, scoped, tag = 'input window, operand 0, single buffered']
    #allocation3 [shape = 's32[1]{0}', space=sflag, size = 0x4, scoped, tag = 'scoped memory for tpu_custom_call.1']
    #allocation4 [shape = 's32[1]{0}', space=sflag, size = 0x4, scoped, tag = 'scoped memory for tpu_custom_call.1']
    #allocation5 [shape = 'u8[4096]{0}', space=vmem, size = 0x1000, scoped, tag = 'input window, operand 1, single buffered']
    #allocation6 [shape = 's32[1]{0}', space=sflag, size = 0x4, scoped, tag = 'scoped memory for tpu_custom_call.1']
    #allocation7 [shape = 'u8[4096]{0}', space=vmem, size = 0x1000, scoped, tag = 'output window, operand 0, single buffered']
    %7 = vsyncpa [#allocation3], 0
    %8 = vsyncpa [#allocation6], 0
    %9 = vsyncpa [#allocation4], 0
    // Predicated region
    $region2: #{tpu_custom_call.1} parent=1 // pred_check
      _
    $region3: #{tpu_custom_call.1} parent=1 // pred_check_branch
      %11 = sbr.rel (0) target = $region5
    $region4: #{tpu_custom_call.1} parent=1 // pred_region
      %s13 = ssub.s32 128, 128
      %14 = vsyncadd [#allocation3], %s13
      %s16 = sshll.u32 [#allocation2], 4
      %s17 = int_to_ptr.vmem [resolvable:$true] %s16
      %19 = dma.hbm_to_vmem [thread:$0]  %s0, 128, %s17, [#allocation3]
    $region5: #{tpu_custom_call.1} parent=1 // pred_fallthru
      _
    // Predicated region
    $region6: #{tpu_custom_call.1} parent=1 // pred_check
      _
    $region7: #{tpu_custom_call.1} parent=1 // pred_check_branch
      %21 = sbr.rel (0) target = $region9
    $region8: #{tpu_custom_call.1} parent=1 // pred_region
      %s23 = ssub.s32 128, 128
      %24 = vsyncadd [#allocation6], %s23
      %s26 = sshll.u32 [#allocation5], 4
      %s27 = int_to_ptr.vmem [resolvable:$true] %s26
      %29 = dma.hbm_to_vmem [thread:$0]  %s1, 128, %s27, [#allocation6]
    $region9: #{tpu_custom_call.1} parent=1 // pred_fallthru
      _
    // Predicated region
    $region10: #{tpu_custom_call.1} parent=1 // pred_check
      _
    $region11: #{tpu_custom_call.1} parent=1 // pred_check_branch
      %31 = sbr.rel (0) target = $region13
    $region12: #{tpu_custom_call.1} parent=1 // pred_region
      %32 = dma.done [#allocation3], 128
    $region13: #{tpu_custom_call.1} parent=1 // pred_fallthru
      _
    // Predicated region
    $region14: #{tpu_custom_call.1} parent=1 // pred_check
      _
    $region15: #{tpu_custom_call.1} parent=1 // pred_check_branch
      %34 = sbr.rel (0) target = $region17
    $region16: #{tpu_custom_call.1} parent=1 // pred_region
      %35 = dma.done [#allocation6], 128
    $region17: #{tpu_custom_call.1} parent=1 // pred_fallthru
      _
    %v36 = vld [vmem:[#allocation2] sm:$0xff]
    %v37 = vld [vmem:[#allocation5] sm:$0xff]
    %v38 = vadd.f32 %v36, %v37
    %vm39 = vcmask 162816
    %40 = vst.msk [vmem:[#allocation7] sm:$0xff] %vm39, %v38
    // Predicated region
    $region18: #{tpu_custom_call.1} parent=1 // pred_check
      _
    $region19: #{tpu_custom_call.1} parent=1 // pred_check_branch
      %42 = sbr.rel (0) target = $region21
    $region20: #{tpu_custom_call.1} parent=1 // pred_region
      %s44 = ssub.s32 128, 128
      %45 = vsyncadd [#allocation4], %s44
      %s47 = sshll.u32 [#allocation7], 4
      %s48 = int_to_ptr.vmem [resolvable:$true] %s47
      %50 = dma.vmem_to_hbm [thread:$0]  %s48, 128, %s2, [#allocation4]
    $region21: #{tpu_custom_call.1} parent=1 // pred_fallthru
      _
    // Predicated region
    $region22: #{tpu_custom_call.1} parent=1 // pred_check
      _
    $region23: #{tpu_custom_call.1} parent=1 // pred_check_branch
      %52 = sbr.rel (0) target = $region25
    $region24: #{tpu_custom_call.1} parent=1 // pred_region
      %53 = dma.done [#allocation4], 128
    $region25: #{tpu_custom_call.1} parent=1 // pred_fallthru
      _
    %54 = vsyncpa [#allocation3], 1
    %55 = vsyncpa [#allocation6], 1
    %56 = vsyncpa [#allocation4], 1

</llo_original>
